<compile_context>
chip_gen: v5e
topology: v5e:2x2
jax: 0.10.0
libtpu: 0.0.40
codegen_flags: <defaults>
</compile_context>

<pallas_src>
import functools

import jax
import jax.numpy as jnp
from jax.experimental import pallas as pl
from jax.experimental.pallas import tpu as pltpu


def _round_up(x, m):
    return (x + m - 1) // m * m


def _vmem_capacity_bytes():
    """Physical VMEM of the local TPU generation (conservative fallback)."""
    try:
        return int(pltpu.get_tpu_info().vmem_capacity_bytes)
    except Exception:
        return 64 << 20   # v7x-sized fallback (safe on every generation)


def _pick_s_chunk(S):
    """Chunk length along sourceL for the streamed VPU contractions."""
    if S <= 128:
        return S
    best = 1
    for c in range(2, 129):           # largest divisor of S that is <= 128
        if S % c == 0:
            best = c
    # If S is (nearly) prime a tiny chunk is worse than one big pass.
    return best if best >= 16 else S


def _global_attention_kernel(x_ref, ctx_ref, w_in_ref, w_out_ref,
                             out_ref, attn_ref, scores_ref, *,
                             s_chunk, n_chunks):
    f32 = jnp.float32
    tb, d = x_ref.shape
    x = x_ref[...]                                                  # (TB, D)

    # target = linear_in(attn_input): dense projection on the MXU, f32 accum.
    target = jnp.dot(x, w_in_ref[...], preferred_element_type=f32)  # (TB, D) f32

    # Pass 1 -- attn scores = bmm(context, target.unsqueeze(2)).squeeze(2).
    # Per-batch matvec (N=1): keep it off the MXU -> VPU multiply + lane
    # reduce, streamed over S chunks so the (TB, tS, D) broadcast-product
    # temporary stays bounded in VMEM.
    unroll = n_chunks <= 8

    def _scores_body(c, carry):
        start = c * s_chunk
        ctx_c = ctx_ref[:, pl.ds(start, s_chunk), :].astype(f32)    # (TB, tS, D)
        scores_ref[:, pl.ds(start, s_chunk)] = jnp.sum(
            ctx_c * target[:, None, :], axis=-1)
        return carry

    jax.lax.fori_loop(0, n_chunks, _scores_body, 0, unroll=unroll)

    # TODO(synk): apply_mask()/self.mask path not implemented (mask=None path).

    # Numerically stable softmax over sourceL (matches nn.Softmax on dim=1).
    # Exact divide (NOT the approx EUP reciprocal) so rows sum to 1 and the
    # kernel matches the PyTorch forward to f32 precision.
    scores = scores_ref[...]                                        # (TB, S) f32
    m = jnp.max(scores, axis=-1, keepdims=True)
    e = jnp.exp(scores - m)
    attn = e / jnp.sum(e, axis=-1, keepdims=True)
    attn_ref[...] = attn.astype(attn_ref.dtype)
    scores_ref[...] = attn             # reuse the f32 scratch for pass 2

    # Pass 2 -- weighted_context = bmm(attn.unsqueeze(1), context).squeeze(1),
    # streamed over the same S chunks with a running (TB, D) f32 accumulator.
    def _wctx_body(c, acc):
        start = c * s_chunk
        ctx_c = ctx_ref[:, pl.ds(start, s_chunk), :].astype(f32)    # (TB, tS, D)
        a_c = scores_ref[:, pl.ds(start, s_chunk)]                  # (TB, tS) f32
        return acc + jnp.sum(a_c[:, :, None] * ctx_c, axis=1)

    weighted = jax.lax.fori_loop(0, n_chunks, _wctx_body,
                                 jnp.zeros((tb, d), f32), unroll=unroll)

    # linear_out(cat([weighted_context, attn_input], 1)) without the concat:
    # static slices of the resident weight ref are free views of its halves.
    combined = (
        jnp.dot(weighted, w_out_ref[:d, :], preferred_element_type=f32)
        + jnp.dot(x, w_out_ref[d:, :], preferred_element_type=f32))

    out_ref[...] = jnp.tanh(combined).astype(out_ref.dtype)


def global_attention(attn_input, context, w_in_t, w_out_t, *, max_batch_tile=None):
    B, D = attn_input.shape
    Bc, S, Dc = context.shape
    assert Bc == B and Dc == D
    dtype = attn_input.dtype
    isz = jnp.dtype(dtype).itemsize

    s_chunk = _pick_s_chunk(S)
    n_chunks = S // s_chunk

    # --- generation-aware VMEM limit: capacity minus headroom, <= 100 MiB ---
    # v7x (64 MiB)  -> ~52 MiB;  v5e/v6e (128 MiB) -> ~100 MiB.
    cap = _vmem_capacity_bytes()
    vmem_limit = int(max(16 << 20, min(cap - (12 << 20), 100 << 20)))

    # --- VMEM accounting (double-buffered inputs incl. both weights, outputs,
    #     f32 scores scratch, broadcast-product / upcast temporaries) ---
    fixed = 2 * (D * D + 2 * D * D) * isz + (2 << 20)   # weights + internal scratch
    per_row = (2 * S * D * isz                          # ctx block (double-buffered)
               + 2 * D * isz                            # x block
               + 2 * D * isz + 2 * S * isz              # out / attn blocks
               + S * 4                                  # scores scratch (f32)
               + 2 * s_chunk * D * 4                    # chunk product + upcast temps
               + 8 * D * 4)                             # target/weighted/combined temps
    tb_budget = max(8, (vmem_limit - fixed) // max(per_row, 1))

    # Batch tile from the budget (up to 256 rows).  For small B the grid may be
    # short; the S-axis online-softmax grid (TODO above) is what would give
    # pipeline depth there.
    TB = int(min(256, tb_budget, _round_up(B, 8)))
    if max_batch_tile is not None:
        TB = min(TB, max(8, int(max_batch_tile)))
    TB = max(8, (TB // 8) * 8)

    Bp = _round_up(B, TB)
    grid = (Bp // TB,)

    # Pad ONLY the batch axis, and only when needed -- the dominant (B, S, D)
    # context stream is never re-materialized.  S and D use full-extent block
    # dims (block dim == array dim), so no (8,128) padding is required; for
    # real models D is a multiple of 128 and output stores stay lane-dense.
    if Bp != B:
        x_in = jnp.pad(attn_input, ((0, Bp - B), (0, 0)))
        ctx_in = jnp.pad(context, ((0, Bp - B), (0, 0), (0, 0)))
    else:
        x_in, ctx_in = attn_input, context

    kernel = functools.partial(_global_attention_kernel,
                               s_chunk=s_chunk, n_chunks=n_chunks)

    out, attn = pl.pallas_call(
        kernel,
        out_shape=(
            jax.ShapeDtypeStruct((Bp, D), dtype),   # context_output
            jax.ShapeDtypeStruct((Bp, S), dtype),   # attn weights
        ),
        grid=grid,
        in_specs=[
            pl.BlockSpec((TB, D), lambda i: (i, 0)),
            pl.BlockSpec((TB, S, D), lambda i: (i, 0, 0)),
            pl.BlockSpec((D, D), lambda i: (0, 0)),         # resident weight
            pl.BlockSpec((2 * D, D), lambda i: (0, 0)),     # resident weight
        ],
        out_specs=(
            pl.BlockSpec((TB, D), lambda i: (i, 0)),
            pl.BlockSpec((TB, S), lambda i: (i, 0)),
        ),
        scratch_shapes=[pltpu.VMEM((TB, S), jnp.float32)],  # f32 scores / attn
        compiler_params=pltpu.CompilerParams(
            dimension_semantics=("parallel",),
            vmem_limit_bytes=vmem_limit),
    )(x_in, ctx_in, w_in_t, w_out_t)

    if Bp != B:
        out, attn = out[:B], attn[:B]
    return out, attn


def reference(attn_input, context, w_in_t, w_out_t):
    """Pure-JAX reference mirroring the PyTorch forward."""
    target = attn_input @ w_in_t                                  # (B, D)
    scores = jnp.einsum('bsd,bd->bs', context, target)            # (B, S)
    attn = jax.nn.softmax(scores, axis=-1)
    weighted = jnp.einsum('bs,bsd->bd', attn, context)            # (B, D)
    combined = jnp.concatenate([weighted, attn_input], axis=1)    # (B, 2D)
    out = jnp.tanh(combined @ w_out_t)                            # (B, D)
    return out, attn


if __name__ == "__main__":
    def make_inputs(key, B, S, D):
        k1, k2, k3, k4 = jax.random.split(key, 4)
        attn_input = jax.random.normal(k1, (B, D), dtype=jnp.float32)
        context = jax.random.normal(k2, (B, S, D), dtype=jnp.float32)
        # nn.Linear(dim, dim, bias=False) / nn.Linear(2*dim, dim, bias=False),
        # stored pre-transposed so the kernel computes x @ W.T directly.
        w_in = jax.random.normal(k3, (D, D), dtype=jnp.float32) * (1.0 / jnp.sqrt(D))
        w_out = jax.random.normal(k4, (D, 2 * D), dtype=jnp.float32) * (1.0 / jnp.sqrt(2.0 * D))
        return attn_input, context, w_in.T, w_out.T

    key = jax.random.PRNGKey(0)
    cases = [
        dict(B=16, S=8,   D=32, max_batch_tile=None),  # single S chunk, grid=(1,)
        dict(B=10, S=192, D=64, max_batch_tile=None),  # multi-chunk S + batch padding
        dict(B=32, S=8,   D=32, max_batch_tile=8),     # multi-step batch-tiled grid
    ]
    for idx, c in enumerate(cases):
        key, sub = jax.random.split(key)
        x, ctx, w_in_t, w_out_t = make_inputs(sub, c["B"], c["S"], c["D"])

        out, attn = global_attention(x, ctx, w_in_t, w_out_t,
                                     max_batch_tile=c["max_batch_tile"])
        jax.block_until_ready((out, attn))

        ref_out, ref_attn = reference(x, ctx, w_in_t, w_out_t)
        assert out.shape == (c["B"], c["D"]) and attn.shape == (c["B"], c["S"])
        assert jnp.allclose(out, ref_out, atol=1e-3, rtol=1e-3), f"case {idx}: out mismatch"
        assert jnp.allclose(attn, ref_attn, atol=1e-3, rtol=1e-3), f"case {idx}: attn mismatch"

    print("KERNEL_OK")
</pallas_src>

<mosaic_0001>
module attributes {stable_mosaic.version = 11 : i64} {
  func.func @_global_attention_kernel(%arg0: i32, %arg1: memref<16x32xf32, #tpu.memory_space<vmem>>, %arg2: memref<16x8x32xf32, #tpu.memory_space<vmem>>, %arg3: memref<32x32xf32, #tpu.memory_space<vmem>>, %arg4: memref<64x32xf32, #tpu.memory_space<vmem>>, %arg5: memref<16x32xf32, #tpu.memory_space<vmem>>, %arg6: memref<16x8xf32, #tpu.memory_space<vmem>>, %arg7: memref<16x8xf32, #tpu.memory_space<vmem>>) attributes {dimension_semantics = [#tpu.dimension_semantics<parallel>], iteration_bounds = array<i64: 1>, scalar_prefetch = 0 : i64, scratch_operands = 1 : i64, tpu.core_type = #tpu.core_type<tc>, window_params = [{transform_indices = @transform_0, window_bounds = array<i64: 16, 32>}, {transform_indices = @transform_1, window_bounds = array<i64: 16, 8, 32>}, {pipeline_mode = #tpu.pipeline_mode<synchronous>, transform_indices = @transform_2, window_bounds = array<i64: 32, 32>}, {pipeline_mode = #tpu.pipeline_mode<synchronous>, transform_indices = @transform_3, window_bounds = array<i64: 64, 32>}, {transform_indices = @transform_4, window_bounds = array<i64: 16, 32>}, {transform_indices = @transform_5, window_bounds = array<i64: 16, 8>}]} {
    %c0 = arith.constant 0 : index
    %c0_0 = arith.constant 0 : index
    %0 = vector.load %arg1[%c0, %c0_0] : memref<16x32xf32, #tpu.memory_space<vmem>>, vector<16x32xf32>
    %c0_1 = arith.constant 0 : index
    %c0_2 = arith.constant 0 : index
    %1 = vector.load %arg3[%c0_1, %c0_2] : memref<32x32xf32, #tpu.memory_space<vmem>>, vector<32x32xf32>
    %cst = arith.constant dense<0.000000e+00> : vector<16x32xf32>
    %2 = tpu.matmul %0, %1, %cst {dimension_numbers = #tpu.dot_dimension_numbers<[1], [0], [0], [1], [0, 0, 1, 1], [], []>} : vector<16x32xf32>, vector<32x32xf32>, vector<16x32xf32> -> vector<16x32xf32>
    %c0_i32 = arith.constant 0 : i32
    %c8_i32 = arith.constant 8 : i32
    %3 = arith.muli %c0_i32, %c8_i32 : i32
    %c0_3 = arith.constant 0 : index
    %4 = arith.index_cast %3 : i32 to index
    %c0_4 = arith.constant 0 : index
    %5 = vector.load %arg2[%c0_3, %4, %c0_4] : memref<16x8x32xf32, #tpu.memory_space<vmem>>, vector<16x8x32xf32>
    %6 = vector.shape_cast %2 : vector<16x32xf32> to vector<16x1x32xf32>
    %7 = vector.broadcast %6 : vector<16x1x32xf32> to vector<16x8x32xf32>
    %8 = arith.mulf %5, %7 : vector<16x8x32xf32>
    %cst_5 = arith.constant dense<0.000000e+00> : vector<16x8xf32>
    %9 = vector.multi_reduction <add>, %8, %cst_5 [2] : vector<16x8x32xf32> to vector<16x8xf32>
    %c0_6 = arith.constant 0 : index
    %10 = arith.index_cast %3 : i32 to index
    %11 = vector.load %arg7[%c0_6, %10] : memref<16x8xf32, #tpu.memory_space<vmem>>, vector<16x8xf32>
    tpu.vector_store %arg7[%c0_6, %10], %9 {strides = array<i32>} : memref<16x8xf32, #tpu.memory_space<vmem>>, vector<16x8xf32>,
    %c1_i32 = arith.constant 1 : i32
    %c0_7 = arith.constant 0 : index
    %c0_8 = arith.constant 0 : index
    %12 = vector.load %arg7[%c0_7, %c0_8] : memref<16x8xf32, #tpu.memory_space<vmem>>, vector<16x8xf32>
    %cst_9 = arith.constant dense<0xFF800000> : vector<16xf32>
    %13 = vector.multi_reduction <maximumf>, %12, %cst_9 [1] : vector<16x8xf32> to vector<16xf32>
    %14 = vector.shape_cast %13 : vector<16xf32> to vector<16x1xf32>
    %15 = vector.broadcast %14 : vector<16x1xf32> to vector<16x8xf32>
    %16 = arith.subf %12, %15 : vector<16x8xf32>
    %17 = math.exp %16 : vector<16x8xf32>
    %cst_10 = arith.constant dense<0.000000e+00> : vector<16xf32>
    %18 = vector.multi_reduction <add>, %17, %cst_10 [1] : vector<16x8xf32> to vector<16xf32>
    %19 = vector.shape_cast %18 : vector<16xf32> to vector<16x1xf32>
    %20 = vector.broadcast %19 : vector<16x1xf32> to vector<16x8xf32>
    %21 = arith.divf %17, %20 : vector<16x8xf32>
    %c0_11 = arith.constant 0 : index
    %c0_12 = arith.constant 0 : index
    %22 = vector.load %arg6[%c0_11, %c0_12] : memref<16x8xf32, #tpu.memory_space<vmem>>, vector<16x8xf32>
    tpu.vector_store %arg6[%c0_11, %c0_12], %21 {strides = array<i32>} : memref<16x8xf32, #tpu.memory_space<vmem>>, vector<16x8xf32>,
    %c0_13 = arith.constant 0 : index
    %c0_14 = arith.constant 0 : index
    %23 = vector.load %arg7[%c0_13, %c0_14] : memref<16x8xf32, #tpu.memory_space<vmem>>, vector<16x8xf32>
    tpu.vector_store %arg7[%c0_13, %c0_14], %21 {strides = array<i32>} : memref<16x8xf32, #tpu.memory_space<vmem>>, vector<16x8xf32>,
    %cst_15 = arith.constant 0.000000e+00 : f32
    %24 = vector.broadcast %cst_15 : f32 to vector<16x32xf32>
    %c0_i32_16 = arith.constant 0 : i32
    %c8_i32_17 = arith.constant 8 : i32
    %25 = arith.muli %c0_i32_16, %c8_i32_17 : i32
    %c0_18 = arith.constant 0 : index
    %26 = arith.index_cast %25 : i32 to index
    %c0_19 = arith.constant 0 : index
    %27 = vector.load %arg2[%c0_18, %26, %c0_19] : memref<16x8x32xf32, #tpu.memory_space<vmem>>, vector<16x8x32xf32>
    %c0_20 = arith.constant 0 : index
    %28 = arith.index_cast %25 : i32 to index
    %29 = vector.load %arg7[%c0_20, %28] : memref<16x8xf32, #tpu.memory_space<vmem>>, vector<16x8xf32>
    %30 = vector.shape_cast %29 : vector<16x8xf32> to vector<16x8x1xf32>
    %31 = vector.broadcast %30 : vector<16x8x1xf32> to vector<16x8x32xf32>
    %32 = arith.mulf %31, %27 : vector<16x8x32xf32>
    %cst_21 = arith.constant dense<0.000000e+00> : vector<16x32xf32>
    %33 = vector.multi_reduction <add>, %32, %cst_21 [1] : vector<16x8x32xf32> to vector<16x32xf32>
    %34 = arith.addf %24, %33 : vector<16x32xf32>
    %c1_i32_22 = arith.constant 1 : i32
    %c0_23 = arith.constant 0 : index
    %c0_24 = arith.constant 0 : index
    %35 = vector.load %arg4[%c0_23, %c0_24] : memref<64x32xf32, #tpu.memory_space<vmem>>, vector<32x32xf32>
    %cst_25 = arith.constant dense<0.000000e+00> : vector<16x32xf32>
    %36 = tpu.matmul %34, %35, %cst_25 {dimension_numbers = #tpu.dot_dimension_numbers<[1], [0], [0], [1], [0, 0, 1, 1], [], []>} : vector<16x32xf32>, vector<32x32xf32>, vector<16x32xf32> -> vector<16x32xf32>
    %c32 = arith.constant 32 : index
    %c0_26 = arith.constant 0 : index
    %37 = vector.load %arg4[%c32, %c0_26] : memref<64x32xf32, #tpu.memory_space<vmem>>, vector<32x32xf32>
    %cst_27 = arith.constant dense<0.000000e+00> : vector<16x32xf32>
    %38 = tpu.matmul %0, %37, %cst_27 {dimension_numbers = #tpu.dot_dimension_numbers<[1], [0], [0], [1], [0, 0, 1, 1], [], []>} : vector<16x32xf32>, vector<32x32xf32>, vector<16x32xf32> -> vector<16x32xf32>
    %39 = arith.addf %36, %38 : vector<16x32xf32>
    %40 = math.tanh %39 : vector<16x32xf32>
    %c0_28 = arith.constant 0 : index
    %c0_29 = arith.constant 0 : index
    %41 = vector.load %arg5[%c0_28, %c0_29] : memref<16x32xf32, #tpu.memory_space<vmem>>, vector<16x32xf32>
    tpu.vector_store %arg5[%c0_28, %c0_29], %40 {strides = array<i32>} : memref<16x32xf32, #tpu.memory_space<vmem>>, vector<16x32xf32>,
    return
  }
  func.func @transform_0(%arg0: i32) -> (i32, i32) {
    %c0_i32 = arith.constant 0 : i32
    %c0_i32_0 = arith.constant 0 : i32
    return %arg0, %c0_i32 : i32, i32
  }
  func.func @transform_1(%arg0: i32) -> (i32, i32, i32) {
    %c0_i32 = arith.constant 0 : i32
    %c0_i32_0 = arith.constant 0 : i32
    %c0_i32_1 = arith.constant 0 : i32
    return %arg0, %c0_i32, %c0_i32_0 : i32, i32, i32
  }
  func.func @transform_2(%arg0: i32) -> (i32, i32) {
    %c0_i32 = arith.constant 0 : i32
    %c0_i32_0 = arith.constant 0 : i32
    %c0_i32_1 = arith.constant 0 : i32
    return %c0_i32, %c0_i32_0 : i32, i32
  }
  func.func @transform_3(%arg0: i32) -> (i32, i32) {
    %c0_i32 = arith.constant 0 : i32
    %c0_i32_0 = arith.constant 0 : i32
    %c0_i32_1 = arith.constant 0 : i32
    return %c0_i32, %c0_i32_0 : i32, i32
  }
  func.func @transform_4(%arg0: i32) -> (i32, i32) {
    %c0_i32 = arith.constant 0 : i32
    %c0_i32_0 = arith.constant 0 : i32
    return %arg0, %c0_i32 : i32, i32
  }
  func.func @transform_5(%arg0: i32) -> (i32, i32) {
    %c0_i32 = arith.constant 0 : i32
    %c0_i32_0 = arith.constant 0 : i32
    return %arg0, %c0_i32 : i32, i32
  }
}

</mosaic_0001>

<llo_original>
// kernel: tpu_custom_call.1
$region0: #{tpu_custom_call.1}
  #allocation0 [shape = 'u32[]', space=smem, size = 0x4, offset = 0x4, fixed_abs, tag = 'smem constant byte address 0x4 - core index']
  #allocation1 [shape = 'u32[72,128]{1,0:T(1,128)}', space=vmem, size = 0x9000, scoped, tag = 'internal scratch']
  #allocation2 [shape = 'f32[16,8]{1,0:T(8,128)}', space=vmem, size = 0x2000, scoped, tag = 'scratch operand']
  %s0 = inlined_call_operand.vmem [shape: f32[16,32], index: 0, kind: input, shape index: {}]
  %s1 = inlined_call_operand.hbm [shape: f32[16,8,32], index: 1, kind: input, shape index: {}]
  %s2 = inlined_call_operand.vmem [shape: f32[32,32], index: 2, kind: input, shape index: {}]
  %s3 = inlined_call_operand.vmem [shape: f32[64,32], index: 3, kind: input, shape index: {}]
  %s4 = inlined_call_operand.hbm [shape: f32[16,32], index: 4, kind: output, shape index: {0}]
  %s5 = inlined_call_operand.vmem [shape: f32[16,8], index: 5, kind: output, shape index: {1}]
  %6 = xla_tuple %s4, %s5
  %s7 = sld [smem:[#allocation0]]
  $region38: #{tpu_custom_call.1} parent=0
    _
  %s9 = ssub.s32 1, %s7
  %s10 = scalar_select 0, %s9, %s7
  $region1: #{tpu_custom_call.1} parent=0
    #allocation3 [shape = 'u8[65536]{0}', space=vmem, size = 0x10000, scoped, tag = 'input window, operand 1, single buffered']
    #allocation4 [shape = 's32[1]{0}', space=sflag, size = 0x4, scoped, tag = 'scoped memory for tpu_custom_call.1']
    #allocation5 [shape = 's32[1]{0}', space=sflag, size = 0x4, scoped, tag = 'scoped memory for tpu_custom_call.1']
    #allocation6 [shape = 'u8[8192]{0}', space=vmem, size = 0x2000, scoped, tag = 'output window, operand 0, single buffered']
    %11 = vsyncpa [#allocation4], 0
    %12 = vsyncpa [#allocation5], 0
    // Predicated region
    $region2: #{tpu_custom_call.1} parent=1 // pred_check
      _
    $region3: #{tpu_custom_call.1} parent=1 // pred_check_branch
      %14 = sbr.rel (0) target = $region5
    $region4: #{tpu_custom_call.1} parent=1 // pred_region
      _
    $region5: #{tpu_custom_call.1} parent=1 // pred_fallthru
      _
    // Predicated region
    $region6: #{tpu_custom_call.1} parent=1 // pred_check
      _
    $region7: #{tpu_custom_call.1} parent=1 // pred_check_branch
      %16 = sbr.rel (0) target = $region9
    $region8: #{tpu_custom_call.1} parent=1 // pred_region
      %18 = vsyncadd [#allocation4], 0
      %s19 = sshll.u32 %s1, 4
      %s20 = int_to_ptr.hbm [resolvable:$true] %s19
      %s21 = sshll.u32 [#allocation3], 4
      %s22 = int_to_ptr.vmem [resolvable:$true] %s21
      %27 = dma.hbm_to_vmem [thread:$0]  %s20, 2048, %s22, [#allocation4], 128, 128, 8
    $region9: #{tpu_custom_call.1} parent=1 // pred_fallthru
      _
    // Predicated region
    $region10: #{tpu_custom_call.1} parent=1 // pred_check
      _
    $region11: #{tpu_custom_call.1} parent=1 // pred_check_branch
      %29 = sbr.rel (0) target = $region13
    $region12: #{tpu_custom_call.1} parent=1 // pred_region
      _
    $region13: #{tpu_custom_call.1} parent=1 // pred_fallthru
      _
    // Predicated region
    $region14: #{tpu_custom_call.1} parent=1 // pred_check
      _
    $region15: #{tpu_custom_call.1} parent=1 // pred_check_branch
      %31 = sbr.rel (0) target = $region17
    $region16: #{tpu_custom_call.1} parent=1 // pred_region
      _
    $region17: #{tpu_custom_call.1} parent=1 // pred_fallthru
      _
    // Predicated region
    $region18: #{tpu_custom_call.1} parent=1 // pred_check
      _
    $region19: #{tpu_custom_call.1} parent=1 // pred_check_branch
      %33 = sbr.rel (0) target = $region21
    $region20: #{tpu_custom_call.1} parent=1 // pred_region
      %35 = dma.done [#allocation4], 2048
    $region21: #{tpu_custom_call.1} parent=1 // pred_fallthru
      _
    %v36 = vld [vmem:[%s0] sm:$0xff]
    %v37 = vld [vmem:[%s0 + $0x8] sm:$0xff]
    %v38 = vld [vmem:[%s2] sm:$0xff]
    %v39 = vld [vmem:[%s2 + $0x8] sm:$0xff]
    %v40 = vld [vmem:[%s2 + $0x10] sm:$0xff]
    %v41 = vld [vmem:[%s2 + $0x18] sm:$0xff]
    %vm42 = vcmask 261120
    %v44 = vsel %vm42, %v36, 0
    %v47 = vsel %vm42, %v37, 0
    %49 = vmatpush.msra.mxu0 0.0
    %50 = vmatpush.msra.mxu0 0.0
    %51 = vmatpush.msra.mxu0 0.0
    %52 = vmatpush.msra.mxu0 0.0
    %53 = vmatpush.msra.mxu0 0.0
    %54 = vmatpush.msra.mxu0 0.0
    %55 = vmatpush.msra.mxu0 0.0
    %56 = vmatpush.msra.mxu0 0.0
    %57 = vmatpush.msra.mxu0 0.0
    %58 = vmatpush.msra.mxu0 0.0
    %59 = vmatpush.msra.mxu0 0.0
    %60 = vmatpush.msra.mxu0 0.0
    %61 = vmatpush.msra.mxu0 %v41
    %62 = vmatpush.msra.mxu0 %v40
    %63 = vmatpush.msra.mxu0 %v39
    %64 = vmatpush.msra.mxu0 %v38
    %65 = vmatmul.f32.gmra.mxu0 %v44
    %v66 = vpop.f32.mrf.mxu0
    %v67 = vadd.f32 0.0, %v66
    %68 = vmatmul.f32.gmra.mxu0 %v47
    %v69 = vpop.f32.mrf.mxu0
    %v70 = vadd.f32 0.0, %v69
    %71 = vdwg.mxu0
    %v72 = vld [vmem:[#allocation3] sm:$0xff]
    %v73 = vld [vmem:[#allocation3 + $0x8] sm:$0xff]
    %v74 = vld [vmem:[#allocation3 + $0x10] sm:$0xff]
    %v75 = vld [vmem:[#allocation3 + $0x18] sm:$0xff]
    %v76 = vld [vmem:[#allocation3 + $0x20] sm:$0xff]
    %v77 = vld [vmem:[#allocation3 + $0x28] sm:$0xff]
    %v78 = vld [vmem:[#allocation3 + $0x30] sm:$0xff]
    %v79 = vld [vmem:[#allocation3 + $0x38] sm:$0xff]
    %v80 = vld [vmem:[#allocation3 + $0x40] sm:$0xff]
    %v81 = vld [vmem:[#allocation3 + $0x48] sm:$0xff]
    %v82 = vld [vmem:[#allocation3 + $0x50] sm:$0xff]
    %v83 = vld [vmem:[#allocation3 + $0x58] sm:$0xff]
    %v84 = vld [vmem:[#allocation3 + $0x60] sm:$0xff]
    %v85 = vld [vmem:[#allocation3 + $0x68] sm:$0xff]
    %v86 = vld [vmem:[#allocation3 + $0x70] sm:$0xff]
    %v87 = vld [vmem:[#allocation3 + $0x78] sm:$0xff]
    %v90 = vrot.slane %v67, 1
    %v91 = vrot.slane %v67, 2
    %v92 = vrot.slane %v67, 3
    %v93 = vrot.slane %v67, 4
    %v94 = vrot.slane %v67, 5
    %v95 = vrot.slane %v67, 6
    %v96 = vrot.slane %v67, 7
    %v97 = vrot.slane %v70, 1
    %v98 = vrot.slane %v70, 2
    %v99 = vrot.slane %v70, 3
    %v100 = vrot.slane %v70, 4
    %v101 = vrot.slane %v70, 5
    %v102 = vrot.slane %v70, 6
    %v103 = vrot.slane %v70, 7
    %v104 = vperm.slane %v67, 0
    %v105 = vperm.slane %v90, 0
    %v106 = vperm.slane %v91, 0
    %v107 = vperm.slane %v92, 0
    %v108 = vperm.slane %v93, 0
    %v109 = vperm.slane %v94, 0
    %v110 = vperm.slane %v95, 0
    %v111 = vperm.slane %v96, 0
    %v112 = vperm.slane %v70, 0
    %v113 = vperm.slane %v97, 0
    %v114 = vperm.slane %v98, 0
    %v115 = vperm.slane %v99, 0
    %v116 = vperm.slane %v100, 0
    %v117 = vperm.slane %v101, 0
    %v118 = vperm.slane %v102, 0
    %v119 = vperm.slane %v103, 0
    %v136 = vmul.f32 %v72, %v104
    %v137 = vmul.f32 %v73, %v105
    %v138 = vmul.f32 %v74, %v106
    %v139 = vmul.f32 %v75, %v107
    %v140 = vmul.f32 %v76, %v108
    %v141 = vmul.f32 %v77, %v109
    %v142 = vmul.f32 %v78, %v110
    %v143 = vmul.f32 %v79, %v111
    %v144 = vmul.f32 %v80, %v112
    %v145 = vmul.f32 %v81, %v113
    %v146 = vmul.f32 %v82, %v114
    %v147 = vmul.f32 %v83, %v115
    %v148 = vmul.f32 %v84, %v116
    %v149 = vmul.f32 %v85, %v117
    %v150 = vmul.f32 %v86, %v118
    %v151 = vmul.f32 %v87, %v119
    %v152 = vsel %vm42, %v136, 0.0
    %153 = vadd.xlane.f32.xlu0 %v152
    %v154 = vpop.xlane.xlu0 %153
    %v155 = vsel %vm42, %v137, 0.0
    %156 = vadd.xlane.f32.xlu0 %v155
    %v157 = vpop.xlane.xlu0 %156
    %v158 = vsel %vm42, %v138, 0.0
    %159 = vadd.xlane.f32.xlu0 %v158
    %v160 = vpop.xlane.xlu0 %159
    %v161 = vsel %vm42, %v139, 0.0
    %162 = vadd.xlane.f32.xlu0 %v161
    %v163 = vpop.xlane.xlu0 %162
    %v164 = vsel %vm42, %v140, 0.0
    %165 = vadd.xlane.f32.xlu0 %v164
    %v166 = vpop.xlane.xlu0 %165
    %v167 = vsel %vm42, %v141, 0.0
    %168 = vadd.xlane.f32.xlu0 %v167
    %v169 = vpop.xlane.xlu0 %168
    %v170 = vsel %vm42, %v142, 0.0
    %171 = vadd.xlane.f32.xlu0 %v170
    %v172 = vpop.xlane.xlu0 %171
    %v173 = vsel %vm42, %v143, 0.0
    %174 = vadd.xlane.f32.xlu0 %v173
    %v175 = vpop.xlane.xlu0 %174
    %v176 = vsel %vm42, %v144, 0.0
    %177 = vadd.xlane.f32.xlu0 %v176
    %v178 = vpop.xlane.xlu0 %177
    %v179 = vsel %vm42, %v145, 0.0
    %180 = vadd.xlane.f32.xlu0 %v179
    %v181 = vpop.xlane.xlu0 %180
    %v182 = vsel %vm42, %v146, 0.0
    %183 = vadd.xlane.f32.xlu0 %v182
    %v184 = vpop.xlane.xlu0 %183
    %v185 = vsel %vm42, %v147, 0.0
    %186 = vadd.xlane.f32.xlu0 %v185
    %v187 = vpop.xlane.xlu0 %186
    %v188 = vsel %vm42, %v148, 0.0
    %189 = vadd.xlane.f32.xlu0 %v188
    %v190 = vpop.xlane.xlu0 %189
    %v191 = vsel %vm42, %v149, 0.0
    %192 = vadd.xlane.f32.xlu0 %v191
    %v193 = vpop.xlane.xlu0 %192
    %v194 = vsel %vm42, %v150, 0.0
    %195 = vadd.xlane.f32.xlu0 %v194
    %v196 = vpop.xlane.xlu0 %195
    %v197 = vsel %vm42, %v151, 0.0
    %198 = vadd.xlane.f32.xlu0 %v197
    %v199 = vpop.xlane.xlu0 %198
    %v216 = vlaneseq
    %v217 = vand.u32 %v216, 127
    %v218 = vperm.slane %v154, %v217
    %v219 = vperm.slane %v157, %v217
    %v220 = vperm.slane %v160, %v217
    %v221 = vperm.slane %v163, %v217
    %v222 = vperm.slane %v166, %v217
    %v223 = vperm.slane %v169, %v217
    %v224 = vperm.slane %v172, %v217
    %v225 = vperm.slane %v175, %v217
    %v226 = vperm.slane %v178, %v217
    %v227 = vperm.slane %v181, %v217
    %v228 = vperm.slane %v184, %v217
    %v229 = vperm.slane %v187, %v217
    %v230 = vperm.slane %v190, %v217
    %v231 = vperm.slane %v193, %v217
    %v232 = vperm.slane %v196, %v217
    %v233 = vperm.slane %v199, %v217
    %vm234 = vcmask 1041409
    %v235 = vsel %vm234, %v219, %v218
    %vm236 = vcmask 1042434
    %v237 = vsel %vm236, %v220, %v235
    %vm238 = vcmask 1043459
    %v239 = vsel %vm238, %v221, %v237
    %vm240 = vcmask 1044484
    %v241 = vsel %vm240, %v222, %v239
    %vm242 = vcmask 1045509
    %v243 = vsel %vm242, %v223, %v241
    %vm244 = vcmask 1046534
    %v245 = vsel %vm244, %v224, %v243
    %vm246 = vcmask 1047559
    %v247 = vsel %vm246, %v225, %v245
    %v248 = vsel %vm234, %v227, %v226
    %v249 = vsel %vm236, %v228, %v248
    %v250 = vsel %vm238, %v229, %v249
    %v251 = vsel %vm240, %v230, %v250
    %v252 = vsel %vm242, %v231, %v251
    %v253 = vsel %vm244, %v232, %v252
    %v254 = vsel %vm246, %v233, %v253
    %vm257 = vcmask 64512
    %258 = vst.msk [vmem:[#allocation2] sm:$0xff] %vm257, %v247
    %259 = vst.msk [vmem:[#allocation2 + $0x8] sm:$0xff] %vm257, %v254
    %v260 = vld [vmem:[#allocation2] sm:$0xff]
    %v261 = vld [vmem:[#allocation2 + $0x8] sm:$0xff]
    %v262 = vsel %vm257, %v260, -inf
    %263 = vmax.xlane.f32.xlu0 %v262
    %v264 = vpop.xlane.xlu0 %263
    %v265 = vsel %vm257, %v261, -inf
    %266 = vmax.xlane.f32.xlu0 %v265
    %v267 = vpop.xlane.xlu0 %266
    %v268 = vsub.f32 %v260, %v264
    %v269 = vsub.f32 %v261, %v267
    %v270 = vmul.f32 %v268, 1.442695
    %v271 = vpow.pop %v270
    %v272 = vmul.f32 %v269, 1.442695
    %v273 = vpow.pop %v272
    %v274 = vsel %vm257, %v271, 0.0
    %275 = vadd.xlane.f32.xlu0 %v274
    %v276 = vpop.xlane.xlu0 %275
    %v277 = vsel %vm257, %v273, 0.0
    %278 = vadd.xlane.f32.xlu0 %v277
    %v279 = vpop.xlane.xlu0 %278
    %v280 = vrcp.pop %v276
    %v281 = vmul.f32 %v276, %v280
    %v282 = vsub.f32 1.0, %v281
    %v283 = vmul.f32 %v280, %v282
    %v284 = vadd.f32 %v280, %v283
    %vm285 = vweird.f32 %v276
    %vm286 = vweird.f32 %v280
    %vm287 = vmor %vm285, %vm286
    %v288 = vsel %vm287, %v280, %v284
    %v289 = vand.u32 2147483647, %v276
    %vm290 = vcmp.eq.f32.partialorder %v289, 8.507059e+37
    %v291 = vand.u32 %v276, 2147483648
    %v292 = vor.u32 1.1754944e-38, %v291
    %v293 = vsel %vm290, %v292, %v288
    %v294 = vmul.f32 %v271, %v293
    %v295 = vrcp.pop %v279
    %v296 = vmul.f32 %v279, %v295
    %v297 = vsub.f32 1.0, %v296
    %v298 = vmul.f32 %v295, %v297
    %v299 = vadd.f32 %v295, %v298
    %vm300 = vweird.f32 %v279
    %vm301 = vweird.f32 %v295
    %vm302 = vmor %vm300, %vm301
    %v303 = vsel %vm302, %v295, %v299
    %v304 = vand.u32 2147483647, %v279
    %vm305 = vcmp.eq.f32.partialorder %v304, 8.507059e+37
    %v306 = vand.u32 %v279, 2147483648
    %v307 = vor.u32 1.1754944e-38, %v306
    %v308 = vsel %vm305, %v307, %v303
    %v309 = vmul.f32 %v273, %v308
    %310 = vst.msk [vmem:[%s5] sm:$0xff] %vm257, %v294
    %311 = vst.msk [vmem:[%s5 + $0x8] sm:$0xff] %vm257, %v309
    %312 = vst.msk [vmem:[#allocation2] sm:$0xff] %vm257, %v294
    %313 = vst.msk [vmem:[#allocation2 + $0x8] sm:$0xff] %vm257, %v309
    %v314 = vld [vmem:[#allocation3] sm:$0xff]
    %v315 = vld [vmem:[#allocation3 + $0x8] sm:$0xff]
    %v316 = vld [vmem:[#allocation3 + $0x10] sm:$0xff]
    %v317 = vld [vmem:[#allocation3 + $0x18] sm:$0xff]
    %v318 = vld [vmem:[#allocation3 + $0x20] sm:$0xff]
    %v319 = vld [vmem:[#allocation3 + $0x28] sm:$0xff]
    %v320 = vld [vmem:[#allocation3 + $0x30] sm:$0xff]
    %v321 = vld [vmem:[#allocation3 + $0x38] sm:$0xff]
    %v322 = vld [vmem:[#allocation3 + $0x40] sm:$0xff]
    %v323 = vld [vmem:[#allocation3 + $0x48] sm:$0xff]
    %v324 = vld [vmem:[#allocation3 + $0x50] sm:$0xff]
    %v325 = vld [vmem:[#allocation3 + $0x58] sm:$0xff]
    %v326 = vld [vmem:[#allocation3 + $0x60] sm:$0xff]
    %v327 = vld [vmem:[#allocation3 + $0x68] sm:$0xff]
    %v328 = vld [vmem:[#allocation3 + $0x70] sm:$0xff]
    %v329 = vld [vmem:[#allocation3 + $0x78] sm:$0xff]
    %v330 = vld [vmem:[#allocation2] sm:$0xff]
    %v331 = vld [vmem:[#allocation2 + $0x8] sm:$0xff]
    %v332 = vperm.slane %v330, 0
    %v333 = vlaneseq
    %v334 = vshrl.u32 %v333, 7
    %336 = vset.pattern.permute.xlu0 %v334
    %337 = vperm.xlu0 %336, %v332
    %v338 = vpop.permute.xlu0 %337
    %v339 = vperm.slane %v330, 1
    %v340 = vlaneseq
    %v341 = vshrl.u32 %v340, 7
    %343 = vset.pattern.permute.xlu0 %v341
    %344 = vperm.xlu0 %343, %v339
    %v345 = vpop.permute.xlu0 %344
    %v346 = vperm.slane %v330, 2
    %v347 = vlaneseq
    %v348 = vshrl.u32 %v347, 7
    %350 = vset.pattern.permute.xlu0 %v348
    %351 = vperm.xlu0 %350, %v346
    %v352 = vpop.permute.xlu0 %351
    %v353 = vperm.slane %v330, 3
    %v354 = vlaneseq
    %v355 = vshrl.u32 %v354, 7
    %357 = vset.pattern.permute.xlu0 %v355
    %358 = vperm.xlu0 %357, %v353
    %v359 = vpop.permute.xlu0 %358
    %v360 = vperm.slane %v330, 4
    %v361 = vlaneseq
    %v362 = vshrl.u32 %v361, 7
    %364 = vset.pattern.permute.xlu0 %v362
    %365 = vperm.xlu0 %364, %v360
    %v366 = vpop.permute.xlu0 %365
    %v367 = vperm.slane %v330, 5
    %v368 = vlaneseq
    %v369 = vshrl.u32 %v368, 7
    %371 = vset.pattern.permute.xlu0 %v369
    %372 = vperm.xlu0 %371, %v367
    %v373 = vpop.permute.xlu0 %372
    %v374 = vperm.slane %v330, 6
    %v375 = vlaneseq
    %v376 = vshrl.u32 %v375, 7
    %378 = vset.pattern.permute.xlu0 %v376
    %379 = vperm.xlu0 %378, %v374
    %v380 = vpop.permute.xlu0 %379
    %v381 = vperm.slane %v330, 7
    %v382 = vlaneseq
    %v383 = vshrl.u32 %v382, 7
    %385 = vset.pattern.permute.xlu0 %v383
    %386 = vperm.xlu0 %385, %v381
    %v387 = vpop.permute.xlu0 %386
    %v388 = vperm.slane %v331, 0
    %v389 = vlaneseq
    %v390 = vshrl.u32 %v389, 7
    %392 = vset.pattern.permute.xlu0 %v390
    %393 = vperm.xlu0 %392, %v388
    %v394 = vpop.permute.xlu0 %393
    %v395 = vperm.slane %v331, 1
    %v396 = vlaneseq
    %v397 = vshrl.u32 %v396, 7
    %399 = vset.pattern.permute.xlu0 %v397
    %400 = vperm.xlu0 %399, %v395
    %v401 = vpop.permute.xlu0 %400
    %v402 = vperm.slane %v331, 2
    %v403 = vlaneseq
    %v404 = vshrl.u32 %v403, 7
    %406 = vset.pattern.permute.xlu0 %v404
    %407 = vperm.xlu0 %406, %v402
    %v408 = vpop.permute.xlu0 %407
    %v409 = vperm.slane %v331, 3
    %v410 = vlaneseq
    %v411 = vshrl.u32 %v410, 7
    %413 = vset.pattern.permute.xlu0 %v411
    %414 = vperm.xlu0 %413, %v409
    %v415 = vpop.permute.xlu0 %414
    %v416 = vperm.slane %v331, 4
    %v417 = vlaneseq
    %v418 = vshrl.u32 %v417, 7
    %420 = vset.pattern.permute.xlu0 %v418
    %421 = vperm.xlu0 %420, %v416
    %v422 = vpop.permute.xlu0 %421
    %v423 = vperm.slane %v331, 5
    %v424 = vlaneseq
    %v425 = vshrl.u32 %v424, 7
    %427 = vset.pattern.permute.xlu0 %v425
    %428 = vperm.xlu0 %427, %v423
    %v429 = vpop.permute.xlu0 %428
    %v430 = vperm.slane %v331, 6
    %v431 = vlaneseq
    %v432 = vshrl.u32 %v431, 7
    %434 = vset.pattern.permute.xlu0 %v432
    %435 = vperm.xlu0 %434, %v430
    %v436 = vpop.permute.xlu0 %435
    %v437 = vperm.slane %v331, 7
    %v438 = vlaneseq
    %v439 = vshrl.u32 %v438, 7
    %441 = vset.pattern.permute.xlu0 %v439
    %442 = vperm.xlu0 %441, %v437
    %v443 = vpop.permute.xlu0 %442
    %v444 = vmul.f32 %v338, %v314
    %v445 = vmul.f32 %v345, %v315
    %v446 = vmul.f32 %v352, %v316
    %v447 = vmul.f32 %v359, %v317
    %v448 = vmul.f32 %v366, %v318
    %v449 = vmul.f32 %v373, %v319
    %v450 = vmul.f32 %v380, %v320
    %v451 = vmul.f32 %v387, %v321
    %v452 = vmul.f32 %v394, %v322
    %v453 = vmul.f32 %v401, %v323
    %v454 = vmul.f32 %v408, %v324
    %v455 = vmul.f32 %v415, %v325
    %v456 = vmul.f32 %v422, %v326
    %v457 = vmul.f32 %v429, %v327
    %v458 = vmul.f32 %v436, %v328
    %v459 = vmul.f32 %v443, %v329
    %v460 = vsel %vm42, %v444, 0.0
    %v461 = vrot.slane %v460, 4
    %v462 = vadd.f32 %v460, %v461
    %v463 = vrot.slane %v462, 2
    %v464 = vadd.f32 %v462, %v463
    %v465 = vrot.slane %v464, 1
    %v466 = vadd.f32 %v464, %v465
    %v467 = vsel %vm42, %v445, 0.0
    %v468 = vrot.slane %v467, 4
    %v469 = vadd.f32 %v467, %v468
    %v470 = vrot.slane %v469, 2
    %v471 = vadd.f32 %v469, %v470
    %v472 = vrot.slane %v471, 1
    %v473 = vadd.f32 %v471, %v472
    %v474 = vsel %vm42, %v446, 0.0
    %v475 = vrot.slane %v474, 4
    %v476 = vadd.f32 %v474, %v475
    %v477 = vrot.slane %v476, 2
    %v478 = vadd.f32 %v476, %v477
    %v479 = vrot.slane %v478, 1
    %v480 = vadd.f32 %v478, %v479
    %v481 = vsel %vm42, %v447, 0.0
    %v482 = vrot.slane %v481, 4
    %v483 = vadd.f32 %v481, %v482
    %v484 = vrot.slane %v483, 2
    %v485 = vadd.f32 %v483, %v484
    %v486 = vrot.slane %v485, 1
    %v487 = vadd.f32 %v485, %v486
    %v488 = vsel %vm42, %v448, 0.0
    %v489 = vrot.slane %v488, 4
    %v490 = vadd.f32 %v488, %v489
    %v491 = vrot.slane %v490, 2
    %v492 = vadd.f32 %v490, %v491
    %v493 = vrot.slane %v492, 1
    %v494 = vadd.f32 %v492, %v493
    %v495 = vsel %vm42, %v449, 0.0
    %v496 = vrot.slane %v495, 4
    %v497 = vadd.f32 %v495, %v496
    %v498 = vrot.slane %v497, 2
    %v499 = vadd.f32 %v497, %v498
    %v500 = vrot.slane %v499, 1
    %v501 = vadd.f32 %v499, %v500
    %v502 = vsel %vm42, %v450, 0.0
    %v503 = vrot.slane %v502, 4
    %v504 = vadd.f32 %v502, %v503
    %v505 = vrot.slane %v504, 2
    %v506 = vadd.f32 %v504, %v505
    %v507 = vrot.slane %v506, 1
    %v508 = vadd.f32 %v506, %v507
    %v509 = vsel %vm42, %v451, 0.0
    %v510 = vrot.slane %v509, 4
    %v511 = vadd.f32 %v509, %v510
    %v512 = vrot.slane %v511, 2
    %v513 = vadd.f32 %v511, %v512
    %v514 = vrot.slane %v513, 1
    %v515 = vadd.f32 %v513, %v514
    %v516 = vsel %vm42, %v452, 0.0
    %v517 = vrot.slane %v516, 4
    %v518 = vadd.f32 %v516, %v517
    %v519 = vrot.slane %v518, 2
    %v520 = vadd.f32 %v518, %v519
    %v521 = vrot.slane %v520, 1
    %v522 = vadd.f32 %v520, %v521
    %v523 = vsel %vm42, %v453, 0.0
    %v524 = vrot.slane %v523, 4
    %v525 = vadd.f32 %v523, %v524
    %v526 = vrot.slane %v525, 2
    %v527 = vadd.f32 %v525, %v526
    %v528 = vrot.slane %v527, 1
    %v529 = vadd.f32 %v527, %v528
    %v530 = vsel %vm42, %v454, 0.0
    %v531 = vrot.slane %v530, 4
    %v532 = vadd.f32 %v530, %v531
    %v533 = vrot.slane %v532, 2
    %v534 = vadd.f32 %v532, %v533
    %v535 = vrot.slane %v534, 1
    %v536 = vadd.f32 %v534, %v535
    %v537 = vsel %vm42, %v455, 0.0
    %v538 = vrot.slane %v537, 4
    %v539 = vadd.f32 %v537, %v538
    %v540 = vrot.slane %v539, 2
    %v541 = vadd.f32 %v539, %v540
    %v542 = vrot.slane %v541, 1
    %v543 = vadd.f32 %v541, %v542
    %v544 = vsel %vm42, %v456, 0.0
    %v545 = vrot.slane %v544, 4
    %v546 = vadd.f32 %v544, %v545
    %v547 = vrot.slane %v546, 2
    %v548 = vadd.f32 %v546, %v547
    %v549 = vrot.slane %v548, 1
    %v550 = vadd.f32 %v548, %v549
    %v551 = vsel %vm42, %v457, 0.0
    %v552 = vrot.slane %v551, 4
    %v553 = vadd.f32 %v551, %v552
    %v554 = vrot.slane %v553, 2
    %v555 = vadd.f32 %v553, %v554
    %v556 = vrot.slane %v555, 1
    %v557 = vadd.f32 %v555, %v556
    %v558 = vsel %vm42, %v458, 0.0
    %v559 = vrot.slane %v558, 4
    %v560 = vadd.f32 %v558, %v559
    %v561 = vrot.slane %v560, 2
    %v562 = vadd.f32 %v560, %v561
    %v563 = vrot.slane %v562, 1
    %v564 = vadd.f32 %v562, %v563
    %v565 = vsel %vm42, %v459, 0.0
    %v566 = vrot.slane %v565, 4
    %v567 = vadd.f32 %v565, %v566
    %v568 = vrot.slane %v567, 2
    %v569 = vadd.f32 %v567, %v568
    %v570 = vrot.slane %v569, 1
    %v571 = vadd.f32 %v569, %v570
    %v572 = vadd.f32 %v466, 0.0
    %v573 = vadd.f32 %v473, 0.0
    %v574 = vadd.f32 %v480, 0.0
    %v575 = vadd.f32 %v487, 0.0
    %v576 = vadd.f32 %v494, 0.0
    %v577 = vadd.f32 %v501, 0.0
    %v578 = vadd.f32 %v508, 0.0
    %v579 = vadd.f32 %v515, 0.0
    %v580 = vadd.f32 %v522, 0.0
    %v581 = vadd.f32 %v529, 0.0
    %v582 = vadd.f32 %v536, 0.0
    %v583 = vadd.f32 %v543, 0.0
    %v584 = vadd.f32 %v550, 0.0
    %v585 = vadd.f32 %v557, 0.0
    %v586 = vadd.f32 %v564, 0.0
    %v587 = vadd.f32 %v571, 0.0
    %v588 = vld [vmem:[%s3] sm:$0xff]
    %v589 = vld [vmem:[%s3 + $0x8] sm:$0xff]
    %v590 = vld [vmem:[%s3 + $0x10] sm:$0xff]
    %v591 = vld [vmem:[%s3 + $0x18] sm:$0xff]
    %v592 = vld [vmem:[%s3 + $0x20] sm:$0xff]
    %v593 = vld [vmem:[%s3 + $0x28] sm:$0xff]
    %v594 = vld [vmem:[%s3 + $0x30] sm:$0xff]
    %v595 = vld [vmem:[%s3 + $0x38] sm:$0xff]
    %596 = vmatpush.msra.mxu0 0.0
    %597 = vmatpush.msra.mxu0 0.0
    %598 = vmatpush.msra.mxu0 0.0
    %599 = vmatpush.msra.mxu0 0.0
    %600 = vmatpush.msra.mxu0 0.0
    %601 = vmatpush.msra.mxu0 0.0
    %602 = vmatpush.msra.mxu0 0.0
    %603 = vmatpush.msra.mxu0 0.0
    %604 = vmatpush.msra.mxu0 0.0
    %605 = vmatpush.msra.mxu0 0.0
    %606 = vmatpush.msra.mxu0 0.0
    %607 = vmatpush.msra.mxu0 0.0
    %608 = vmatpush.msra.mxu0 %v595
    %609 = vmatpush.msra.mxu0 %v594
    %610 = vmatpush.msra.mxu0 %v593
    %611 = vmatpush.msra.mxu0 %v592
    %612 = vmatmul.f32.gmra.mxu0 %v44
    %v613 = vpop.f32.mrf.mxu0
    %v614 = vadd.f32 0.0, %v613
    %615 = vmatmul.f32.gmra.mxu0 %v47
    %v616 = vpop.f32.mrf.mxu0
    %v617 = vadd.f32 0.0, %v616
    %618 = vdwg.mxu0
    %v635 = vsel %vm234, %v573, %v572
    %v636 = vsel %vm236, %v574, %v635
    %v637 = vsel %vm238, %v575, %v636
    %v638 = vsel %vm240, %v576, %v637
    %v639 = vsel %vm242, %v577, %v638
    %v640 = vsel %vm244, %v578, %v639
    %v641 = vsel %vm246, %v579, %v640
    %v642 = vsel %vm234, %v581, %v580
    %v643 = vsel %vm236, %v582, %v642
    %v644 = vsel %vm238, %v583, %v643
    %v645 = vsel %vm240, %v584, %v644
    %v646 = vsel %vm242, %v585, %v645
    %v647 = vsel %vm244, %v586, %v646
    %v648 = vsel %vm246, %v587, %v647
    %v649 = vsel %vm42, %v641, 0
    %v651 = vsel %vm42, %v648, 0
    %653 = vmatpush.msra.mxu0 0.0
    %654 = vmatpush.msra.mxu0 0.0
    %655 = vmatpush.msra.mxu0 0.0
    %656 = vmatpush.msra.mxu0 0.0
    %657 = vmatpush.msra.mxu0 0.0
    %658 = vmatpush.msra.mxu0 0.0
    %659 = vmatpush.msra.mxu0 0.0
    %660 = vmatpush.msra.mxu0 0.0
    %661 = vmatpush.msra.mxu0 0.0
    %662 = vmatpush.msra.mxu0 0.0
    %663 = vmatpush.msra.mxu0 0.0
    %664 = vmatpush.msra.mxu0 0.0
    %665 = vmatpush.msra.mxu0 %v591
    %666 = vmatpush.msra.mxu0 %v590
    %667 = vmatpush.msra.mxu0 %v589
    %668 = vmatpush.msra.mxu0 %v588
    %669 = vmatmul.f32.gmra.mxu0 %v649
    %v670 = vpop.f32.mrf.mxu0
    %v671 = vadd.f32 %v614, %v670
    %672 = vmatmul.f32.gmra.mxu0 %v651
    %v673 = vpop.f32.mrf.mxu0
    %v674 = vadd.f32 %v617, %v673
    %675 = vdwg.mxu0
    %v676 = vtanh.pop %v671
    %v677 = vtanh.pop %v674
    %678 = vst.msk [vmem:[#allocation6] sm:$0xff] %vm42, %v676
    %679 = vst.msk [vmem:[#allocation6 + $0x8] sm:$0xff] %vm42, %v677
    // Predicated region
    $region22: #{tpu_custom_call.1} parent=1 // pred_check
      _
    $region23: #{tpu_custom_call.1} parent=1 // pred_check_branch
      %681 = sbr.rel (0) target = $region25
    $region24: #{tpu_custom_call.1} parent=1 // pred_region
      %683 = vsyncadd [#allocation5], 0
      %s684 = sshll.u32 [#allocation6], 4
      %s685 = int_to_ptr.vmem [resolvable:$true] %s684
      %s686 = sshll.u32 %s4, 4
      %s687 = int_to_ptr.hbm [resolvable:$true] %s686
      %692 = dma.vmem_to_hbm [thread:$0]  %s685, 256, %s687, [#allocation5], 128, 128, 8
    $region25: #{tpu_custom_call.1} parent=1 // pred_fallthru
      _
    // Predicated region
    $region26: #{tpu_custom_call.1} parent=1 // pred_check
      _
    $region27: #{tpu_custom_call.1} parent=1 // pred_check_branch
      %694 = sbr.rel (0) target = $region29
    $region28: #{tpu_custom_call.1} parent=1 // pred_region
      _
    $region29: #{tpu_custom_call.1} parent=1 // pred_fallthru
      _
    // Predicated region
    $region30: #{tpu_custom_call.1} parent=1 // pred_check
      _
    $region31: #{tpu_custom_call.1} parent=1 // pred_check_branch
      %696 = sbr.rel (0) target = $region33
    $region32: #{tpu_custom_call.1} parent=1 // pred_region
      %698 = dma.done [#allocation5], 256
    $region33: #{tpu_custom_call.1} parent=1 // pred_fallthru
      _
    // Predicated region
    $region34: #{tpu_custom_call.1} parent=1 // pred_check
      _
    $region35: #{tpu_custom_call.1} parent=1 // pred_check_branch
      %700 = sbr.rel (0) target = $region37
    $region36: #{tpu_custom_call.1} parent=1 // pred_region
      _
    $region37: #{tpu_custom_call.1} parent=1 // pred_fallthru
      _
    %701 = vsyncpa [#allocation4], 1
    %702 = vsyncpa [#allocation5], 1

</llo_original>
